<compile_context>
chip_gen: v7x
topology: tpu7x:2x2x1
jax: 0.10.0
libtpu: 0.0.40
codegen_flags: <defaults>
</compile_context>

<pallas_src>
import math
import jax
import jax.numpy as jnp
from jax.experimental import pallas as pl
from jax.experimental.pallas import tpu as pltpu


def _round_up(n, m):
    return ((n + m - 1) // m) * m


def _nbytes(a):
    return a.size * a.dtype.itemsize


# ---------------------------------------------------------------------------
# Kernel
# ---------------------------------------------------------------------------
def mlp_kernel(x_ref, w1_ref, b1_ref, w2_ref, b2_ref, w3_ref, b3_ref, o_ref):
    # Layer 1: cast the f32 activation tile to the matmul dtype in-kernel (cheap
    # VPU op hidden by the pipeline); MXU accumulates in f32.
    x = x_ref[...].astype(w1_ref.dtype)
    h = jnp.dot(x, w1_ref[...], preferred_element_type=jnp.float32)
    # Bias-add / ReLU in f32 (v5e has no bf16 VALU); cast narrow right after so
    # the (tm, hid) intermediate lives as bf16 between layers.
    h = jnp.maximum(h + b1_ref[...], 0.0).astype(w2_ref.dtype)
    # Layer 2
    h = jnp.dot(h, w2_ref[...], preferred_element_type=jnp.float32)
    h = jnp.maximum(h + b2_ref[...], 0.0).astype(w3_ref.dtype)
    # Layer 3 (the PyTorch Sequential ends in a ReLU)
    h = jnp.dot(h, w3_ref[...], preferred_element_type=jnp.float32)
    h = jnp.maximum(h + b3_ref[...], 0.0)
    o_ref[...] = h.astype(o_ref.dtype)


# ---------------------------------------------------------------------------
# One-time weight preparation (hoisted out of the forward path)
# ---------------------------------------------------------------------------
def prepare_params(params, *, matmul_dtype=jnp.bfloat16):
    """Pad / cast the weights ONCE, not per forward call.

    Zero padding keeps semantics exact: padded weight rows/cols and biases are
    zero, so padded lanes stay zero through every ReLU and are sliced off after
    the kernel. The pure-contraction dim (in_dim) is NOT padded. Pass
    matmul_dtype=jnp.float32 for a full-fidelity (f32 MXU) path.
    """
    in_dim, hid = params["W1"].shape
    out_dim = params["W3"].shape[1]

    hid_p = _round_up(hid, 128)                                   # lane-dense intermediates
    out_p = _round_up(out_dim, 128) if out_dim >= 128 else out_dim  # tiny out: unpadded

    def pad2(a, rows, cols, dtype):
        a = jnp.pad(a, ((0, rows - a.shape[0]), (0, cols - a.shape[1])))
        return a.astype(dtype)

    prepared = {
        "W1": pad2(params["W1"], in_dim, hid_p, matmul_dtype),
        "b1": pad2(params["b1"], 1, hid_p, jnp.float32),
        "W2": pad2(params["W2"], hid_p, hid_p, matmul_dtype),
        "b2": pad2(params["b2"], 1, hid_p, jnp.float32),
        "W3": pad2(params["W3"], hid_p, out_p, matmul_dtype),
        "b3": pad2(params["b3"], 1, out_p, jnp.float32),
    }
    meta = dict(in_dim=in_dim, hid=hid, out_dim=out_dim, hid_p=hid_p, out_p=out_p)
    return prepared, meta


def _resident_spec(shape):
    """Grid-invariant (weight/bias) spec: single-buffered -> 1x VMEM footprint."""
    idx = lambda i: (0, 0)
    try:
        return pl.BlockSpec(shape, idx, pipeline_mode=pl.Buffered(1))
    except TypeError:  # older jax without pipeline_mode: default double-buffering
        return pl.BlockSpec(shape, idx)


def _pick_tm(B, *, tm_cap=256, min_grid=2):
    """Row tile: enough tiles that each fits tm_cap; >=2 tiles (both v7x cores)
    once the batch is big enough to split; rounded to 16 (bf16 sublane packing)."""
    n_tiles = max(pl.cdiv(B, tm_cap), min_grid if B >= 32 else 1)
    tm = _round_up(pl.cdiv(B, n_tiles), 16)
    return min(tm, _round_up(B, 16))


# ---------------------------------------------------------------------------
# Forward
# ---------------------------------------------------------------------------
def mlp_forward(x, prepared, meta, *, tm_cap=256):
    """x: [B, input_size] float32; prepared/meta from prepare_params()."""
    B, in_dim = x.shape
    assert in_dim == meta["in_dim"], "input feature dim mismatch"
    hid_p, out_p, out_dim = meta["hid_p"], meta["out_p"], meta["out_dim"]

    tm = _pick_tm(B, tm_cap=tm_cap)
    B_pad = _round_up(B, tm)
    xp = jnp.pad(x, ((0, B_pad - B), (0, 0)))     # row padding only; stays f32
    grid = (B_pad // tm,)

    w1, b1 = prepared["W1"], prepared["b1"]
    w2, b2 = prepared["W2"], prepared["b2"]
    w3, b3 = prepared["W3"], prepared["b3"]
    weight_bytes = sum(_nbytes(a) for a in (w1, b1, w2, b2, w3, b3))

    # Chip-aware VMEM budget: 1x resident weights (single-buffered) +
    # double-buffered x/out tiles + intermediate-activation headroom.
    try:
        vmem_cap = int(pltpu.get_tpu_info().vmem_capacity_bytes)
    except Exception:
        vmem_cap = 64 << 20  # conservative (v7x per-TC)
    io_bytes = 2 * tm * (in_dim * x.dtype.itemsize + out_p * 4)
    act_bytes = 2 * tm * hid_p * 4
    vmem_limit = int(weight_bytes + io_bytes + act_bytes + (8 << 20))
    vmem_limit = int(min(max(vmem_limit, 8 << 20), int(vmem_cap * 0.75)))

    if weight_bytes > vmem_cap // 2:
        # TODO(synk): hid-tiled accumulator path (extra "arbitrary" grid axis +
        # (tm, N) f32 VMEM accumulator, pl.when init/finalize) for hidden sizes
        # whose resident weights exceed VMEM (hits first on v7x's 64 MiB).
        raise NotImplementedError(
            "resident weights exceed the VMEM budget; hid-tiled path not implemented")

    flops = 2 * B_pad * (in_dim * hid_p + hid_p * hid_p + hid_p * out_p)
    bytes_accessed = _nbytes(xp) + weight_bytes + B_pad * out_p * 4
    cost = pl.CostEstimate(flops=flops, transcendentals=0,
                           bytes_accessed=bytes_accessed)

    out_padded = pl.pallas_call(
        mlp_kernel,
        out_shape=jax.ShapeDtypeStruct((B_pad, out_p), jnp.float32),
        grid_spec=pltpu.PrefetchScalarGridSpec(
            num_scalar_prefetch=0,
            grid=grid,
            in_specs=[
                pl.BlockSpec((tm, in_dim), lambda i: (i, 0)),  # x tile (f32, K unpadded)
                _resident_spec((in_dim, hid_p)),               # W1
                _resident_spec((1, hid_p)),                    # b1
                _resident_spec((hid_p, hid_p)),                # W2
                _resident_spec((1, hid_p)),                    # b2
                _resident_spec((hid_p, out_p)),                # W3
                _resident_spec((1, out_p)),                    # b3
            ],
            out_specs=pl.BlockSpec((tm, out_p), lambda i: (i, 0)),
        ),
        compiler_params=pltpu.CompilerParams(
            dimension_semantics=("parallel",),
            vmem_limit_bytes=vmem_limit,
        ),
        cost_estimate=cost,
    )(xp, w1, b1, w2, b2, w3, b3)

    return out_padded[:B, :out_dim]


# ---------------------------------------------------------------------------
# Init / reference / test
# ---------------------------------------------------------------------------
def init_params(key, input_size, hidden_size, output_size):
    """Deterministic init mimicking torch.nn.Linear (uniform +-1/sqrt(fan_in)).
    Weights stored as [in_features, out_features] (transposed vs PyTorch)."""
    ks = jax.random.split(key, 6)

    def linear(kw, kb, fan_in, fan_out):
        bound = 1.0 / math.sqrt(fan_in)
        W = jax.random.uniform(kw, (fan_in, fan_out), jnp.float32, -bound, bound)
        b = jax.random.uniform(kb, (1, fan_out), jnp.float32, -bound, bound)
        return W, b

    W1, b1 = linear(ks[0], ks[1], input_size, hidden_size)
    W2, b2 = linear(ks[2], ks[3], hidden_size, hidden_size)
    W3, b3 = linear(ks[4], ks[5], hidden_size, output_size)
    return {"W1": W1, "b1": b1, "W2": W2, "b2": b2, "W3": W3, "b3": b3}


def mlp_reference(x, p, matmul_dtype=jnp.float32):
    def layer(h, w, b):
        y = jnp.dot(h.astype(matmul_dtype), w.astype(matmul_dtype),
                    preferred_element_type=jnp.float32)
        return jnp.maximum(y + b, 0.0)
    h = layer(x, p["W1"], p["b1"])
    h = layer(h, p["W2"], p["b2"])
    h = layer(h, p["W3"], p["b3"])
    return h


if __name__ == "__main__":
    key = jax.random.PRNGKey(0)
    k_x, k_p = jax.random.split(key)

    # Small but non-trivial: batch deliberately NOT a multiple of the row tile
    # (exercises the padding path) and large enough for a 2-step grid.
    batch = 200
    input_size, hidden_size, output_size = 32, 64, 16

    x = jax.random.normal(k_x, (batch, input_size), dtype=jnp.float32)
    params = init_params(k_p, input_size, hidden_size, output_size)

    # Pad/cast weights ONCE, outside the forward path (per perf review).
    prepared, meta = prepare_params(params, matmul_dtype=jnp.bfloat16)

    out = mlp_forward(x, prepared, meta)
    out = jax.block_until_ready(out)

    ref_bf16 = mlp_reference(x, params, matmul_dtype=jnp.bfloat16)
    ref_f32 = mlp_reference(x, params, matmul_dtype=jnp.float32)

    assert out.shape == (batch, output_size)
    assert jnp.allclose(out, ref_bf16, atol=1e-3, rtol=1e-3), \
        "mismatch vs bf16-matmul reference"
    assert jnp.allclose(out, ref_f32, atol=5e-2, rtol=5e-2), \
        "mismatch vs f32 reference"

    print("KERNEL_OK")
</pallas_src>

<mosaic_0001>
module attributes {stable_mosaic.version = 11 : i64} {
  func.func @mlp_kernel(%arg0: i32, %arg1: memref<112x32xf32, #tpu.memory_space<vmem>>, %arg2: memref<32x128xbf16, #tpu.memory_space<vmem>>, %arg3: memref<1x128xf32, #tpu.memory_space<vmem>>, %arg4: memref<128x128xbf16, #tpu.memory_space<vmem>>, %arg5: memref<1x128xf32, #tpu.memory_space<vmem>>, %arg6: memref<128x16xbf16, #tpu.memory_space<vmem>>, %arg7: memref<1x16xf32, #tpu.memory_space<vmem>>, %arg8: memref<112x16xf32, #tpu.memory_space<vmem>>) attributes {dimension_semantics = [#tpu.dimension_semantics<parallel>], iteration_bounds = array<i64: 2>, scalar_prefetch = 0 : i64, scratch_operands = 0 : i64, tpu.core_type = #tpu.core_type<tc>, window_params = [{transform_indices = @transform_0, window_bounds = array<i64: 112, 32>}, {pipeline_mode = #tpu.pipeline_mode<synchronous>, transform_indices = @transform_1, window_bounds = array<i64: 32, 128>}, {pipeline_mode = #tpu.pipeline_mode<synchronous>, transform_indices = @transform_2, window_bounds = array<i64: 1, 128>}, {pipeline_mode = #tpu.pipeline_mode<synchronous>, transform_indices = @transform_3, window_bounds = array<i64: 128, 128>}, {pipeline_mode = #tpu.pipeline_mode<synchronous>, transform_indices = @transform_4, window_bounds = array<i64: 1, 128>}, {pipeline_mode = #tpu.pipeline_mode<synchronous>, transform_indices = @transform_5, window_bounds = array<i64: 128, 16>}, {pipeline_mode = #tpu.pipeline_mode<synchronous>, transform_indices = @transform_6, window_bounds = array<i64: 1, 16>}, {transform_indices = @transform_7, window_bounds = array<i64: 112, 16>}]} {
    %c0 = arith.constant 0 : index
    %c0_0 = arith.constant 0 : index
    %0 = vector.load %arg1[%c0, %c0_0] : memref<112x32xf32, #tpu.memory_space<vmem>>, vector<112x32xf32>
    %1 = arith.truncf %0 : vector<112x32xf32> to vector<112x32xbf16>
    %c0_1 = arith.constant 0 : index
    %c0_2 = arith.constant 0 : index
    %2 = vector.load %arg2[%c0_1, %c0_2] : memref<32x128xbf16, #tpu.memory_space<vmem>>, vector<32x128xbf16>
    %cst = arith.constant dense<0.000000e+00> : vector<112x128xf32>
    %3 = tpu.matmul %1, %2, %cst {dimension_numbers = #tpu.dot_dimension_numbers<[1], [0], [0], [1], [0, 0, 1, 1], [], []>} : vector<112x32xbf16>, vector<32x128xbf16>, vector<112x128xf32> -> vector<112x128xf32>
    %c0_3 = arith.constant 0 : index
    %c0_4 = arith.constant 0 : index
    %4 = vector.load %arg3[%c0_3, %c0_4] : memref<1x128xf32, #tpu.memory_space<vmem>>, vector<1x128xf32>
    %5 = vector.broadcast %4 : vector<1x128xf32> to vector<112x128xf32>
    %6 = arith.addf %3, %5 : vector<112x128xf32>
    %cst_5 = arith.constant 0.000000e+00 : f32
    %7 = vector.broadcast %cst_5 : f32 to vector<112x128xf32>
    %8 = arith.maximumf %6, %7 : vector<112x128xf32>
    %9 = arith.truncf %8 : vector<112x128xf32> to vector<112x128xbf16>
    %c0_6 = arith.constant 0 : index
    %c0_7 = arith.constant 0 : index
    %10 = vector.load %arg4[%c0_6, %c0_7] : memref<128x128xbf16, #tpu.memory_space<vmem>>, vector<128x128xbf16>
    %cst_8 = arith.constant dense<0.000000e+00> : vector<112x128xf32>
    %11 = tpu.matmul %9, %10, %cst_8 {dimension_numbers = #tpu.dot_dimension_numbers<[1], [0], [0], [1], [0, 0, 1, 1], [], []>} : vector<112x128xbf16>, vector<128x128xbf16>, vector<112x128xf32> -> vector<112x128xf32>
    %c0_9 = arith.constant 0 : index
    %c0_10 = arith.constant 0 : index
    %12 = vector.load %arg5[%c0_9, %c0_10] : memref<1x128xf32, #tpu.memory_space<vmem>>, vector<1x128xf32>
    %13 = vector.broadcast %12 : vector<1x128xf32> to vector<112x128xf32>
    %14 = arith.addf %11, %13 : vector<112x128xf32>
    %cst_11 = arith.constant 0.000000e+00 : f32
    %15 = vector.broadcast %cst_11 : f32 to vector<112x128xf32>
    %16 = arith.maximumf %14, %15 : vector<112x128xf32>
    %17 = arith.truncf %16 : vector<112x128xf32> to vector<112x128xbf16>
    %c0_12 = arith.constant 0 : index
    %c0_13 = arith.constant 0 : index
    %18 = vector.load %arg6[%c0_12, %c0_13] : memref<128x16xbf16, #tpu.memory_space<vmem>>, vector<128x16xbf16>
    %cst_14 = arith.constant dense<0.000000e+00> : vector<112x16xf32>
    %19 = tpu.matmul %17, %18, %cst_14 {dimension_numbers = #tpu.dot_dimension_numbers<[1], [0], [0], [1], [0, 0, 1, 1], [], []>} : vector<112x128xbf16>, vector<128x16xbf16>, vector<112x16xf32> -> vector<112x16xf32>
    %c0_15 = arith.constant 0 : index
    %c0_16 = arith.constant 0 : index
    %20 = vector.load %arg7[%c0_15, %c0_16] : memref<1x16xf32, #tpu.memory_space<vmem>>, vector<1x16xf32>
    %21 = vector.broadcast %20 : vector<1x16xf32> to vector<112x16xf32>
    %22 = arith.addf %19, %21 : vector<112x16xf32>
    %cst_17 = arith.constant 0.000000e+00 : f32
    %23 = vector.broadcast %cst_17 : f32 to vector<112x16xf32>
    %24 = arith.maximumf %22, %23 : vector<112x16xf32>
    %c0_18 = arith.constant 0 : index
    %c0_19 = arith.constant 0 : index
    %25 = vector.load %arg8[%c0_18, %c0_19] : memref<112x16xf32, #tpu.memory_space<vmem>>, vector<112x16xf32>
    tpu.vector_store %arg8[%c0_18, %c0_19], %24 {strides = array<i32>} : memref<112x16xf32, #tpu.memory_space<vmem>>, vector<112x16xf32>,
    return
  }
  func.func @transform_0(%arg0: i32) -> (i32, i32) {
    %c0_i32 = arith.constant 0 : i32
    %c0_i32_0 = arith.constant 0 : i32
    return %arg0, %c0_i32 : i32, i32
  }
  func.func @transform_1(%arg0: i32) -> (i32, i32) {
    %c0_i32 = arith.constant 0 : i32
    %c0_i32_0 = arith.constant 0 : i32
    %c0_i32_1 = arith.constant 0 : i32
    return %c0_i32, %c0_i32_0 : i32, i32
  }
  func.func @transform_2(%arg0: i32) -> (i32, i32) {
    %c0_i32 = arith.constant 0 : i32
    %c0_i32_0 = arith.constant 0 : i32
    %c0_i32_1 = arith.constant 0 : i32
    return %c0_i32, %c0_i32_0 : i32, i32
  }
  func.func @transform_3(%arg0: i32) -> (i32, i32) {
    %c0_i32 = arith.constant 0 : i32
    %c0_i32_0 = arith.constant 0 : i32
    %c0_i32_1 = arith.constant 0 : i32
    return %c0_i32, %c0_i32_0 : i32, i32
  }
  func.func @transform_4(%arg0: i32) -> (i32, i32) {
    %c0_i32 = arith.constant 0 : i32
    %c0_i32_0 = arith.constant 0 : i32
    %c0_i32_1 = arith.constant 0 : i32
    return %c0_i32, %c0_i32_0 : i32, i32
  }
  func.func @transform_5(%arg0: i32) -> (i32, i32) {
    %c0_i32 = arith.constant 0 : i32
    %c0_i32_0 = arith.constant 0 : i32
    %c0_i32_1 = arith.constant 0 : i32
    return %c0_i32, %c0_i32_0 : i32, i32
  }
  func.func @transform_6(%arg0: i32) -> (i32, i32) {
    %c0_i32 = arith.constant 0 : i32
    %c0_i32_0 = arith.constant 0 : i32
    %c0_i32_1 = arith.constant 0 : i32
    return %c0_i32, %c0_i32_0 : i32, i32
  }
  func.func @transform_7(%arg0: i32) -> (i32, i32) {
    %c0_i32 = arith.constant 0 : i32
    %c0_i32_0 = arith.constant 0 : i32
    return %arg0, %c0_i32 : i32, i32
  }
}

</mosaic_0001>

<llo_original>
// kernel: tpu_custom_call.1
$region0: #{tpu_custom_call.1}
  #allocation0 [shape = 'u32[]', space=smem, size = 0x4, offset = 0x4, fixed_abs, tag = 'smem constant byte address 0x4 - core index']
  #allocation1 [shape = 'u32[144,128]{1,0:T(1,128)}', space=vmem, size = 0x12000, scoped, tag = 'internal scratch']
  %s0 = inlined_call_operand.vmem [shape: f32[224,32], index: 0, kind: input, shape index: {}]
  %s1 = inlined_call_operand.vmem [shape: bf16[32,128], index: 1, kind: input, shape index: {}]
  %s2 = inlined_call_operand.vmem [shape: f32[1,128], index: 2, kind: input, shape index: {}]
  %s3 = inlined_call_operand.vmem [shape: bf16[128,128], index: 3, kind: input, shape index: {}]
  %s4 = inlined_call_operand.vmem [shape: f32[1,128], index: 4, kind: input, shape index: {}]
  %s5 = inlined_call_operand.vmem [shape: bf16[128,16], index: 5, kind: input, shape index: {}]
  %s6 = inlined_call_operand.vmem [shape: f32[1,16], index: 6, kind: input, shape index: {}]
  %s7 = inlined_call_operand.vmem [shape: f32[224,16], index: 7, kind: output, shape index: {}]
  %s8 = sld [smem:[#allocation0]]
  $region61: #{tpu_custom_call.1} parent=0
    _
  %s10 = ssub.s32 1, %s8
  %s11 = scalar_select 0, %s10, %s8
  loop: start=0, step=1, limit=4
  $region2: #{tpu_custom_call.1} parent=0 // loop_pre_header
    _
  $region3: #{tpu_custom_call.1} parent=0 // loop_header
    %s13 = sphi 0, %s17
    %p14 = scmp.ge.s32.totalorder %s13, 4
    %s23 = sphi 0, %s25
    %s26 = sphi 0, %s23
    %s27 = sphi 0, %s26
    %s43 = sphi 0, %s27
    %s47 = sphi 0, %s47
    %s49 = sphi 0, %s47
    %s50 = sphi 0, %s49
    %s64 = sphi 0, %s50
    %s68 = sphi 0, %s68
    %s70 = sphi 0, %s68
    %s71 = sphi 0, %s70
    %s85 = sphi 0, %s71
    %s89 = sphi 0, %s89
    %s91 = sphi 0, %s89
    %s92 = sphi 0, %s91
    %s106 = sphi 0, %s92
    %s110 = sphi 0, %s110
    %s112 = sphi 0, %s110
    %s113 = sphi 0, %s112
    %s127 = sphi 0, %s113
    %s131 = sphi 0, %s131
    %s133 = sphi 0, %s131
    %s134 = sphi 0, %s133
    %s148 = sphi 0, %s134
    %s152 = sphi 0, %s152
    %s154 = sphi 0, %s152
    %s155 = sphi 0, %s154
    %s169 = sphi 0, %s155
    %s175 = sphi 0, %s177
    %s178 = sphi 0, %s175
    %s179 = sphi 0, %s178
    %s195 = sphi 0, %s179
  $region4: #{tpu_custom_call.1} parent=0 // loop_header_branch
    %16 = sbr.rel (%p14) target = $region8
  $region5: #{tpu_custom_call.1} parent=0 // loop_body
    %s18 = ssub.s32 %s13, 1
    %s19 = ssub.s32 %s13, 2
    %s20 = sadd.s32 %s13, 1
    %s21 = ssub.s32 %s13, %s20
    %p22 = scmp.eq.s32.totalorder %s21, 0
    %s24 = sadd.s32 %s23, 1
    %s25 = scalar_select %p22, %s23, %s24
    %p28 = pneg %p22
    %p29 = scmp.eq.s32.totalorder %s13, 1
    %p30 = por %p28, %p29
    %p31 = scmp.ne.s32.totalorder %s23, %s26
    %p32 = scmp.eq.s32.totalorder %s13, 0
    %p33 = por %p31, %p32
    %p34 = scmp.ne.s32.totalorder %s23, %s26
    %p35 = scmp.eq.s32.totalorder %s18, 1
    %p36 = por %p34, %p35
    %p37 = scmp.ne.s32.totalorder %s26, %s27
    %p38 = scmp.eq.s32.totalorder %s18, 0
    %p39 = por %p37, %p38
    %p40 = scmp.ne.s32.totalorder %s26, %s27
    %p41 = scmp.eq.s32.totalorder %s19, 1
    %p42 = por %p40, %p41
    %p44 = scmp.ne.s32.totalorder %s27, %s43
    %p45 = scmp.eq.s32.totalorder %s19, 0
    %p46 = por %p44, %p45
    %s48 = sadd.s32 %s47, 1
    %p51 = scmp.eq.s32.totalorder %s13, 1
    %p52 = scmp.ne.s32.totalorder %s47, %s49
    %p53 = scmp.eq.s32.totalorder %s13, 0
    %p54 = por %p52, %p53
    %p55 = scmp.ne.s32.totalorder %s47, %s49
    %p56 = scmp.eq.s32.totalorder %s18, 1
    %p57 = por %p55, %p56
    %p58 = scmp.ne.s32.totalorder %s49, %s50
    %p59 = scmp.eq.s32.totalorder %s18, 0
    %p60 = por %p58, %p59
    %p61 = scmp.ne.s32.totalorder %s49, %s50
    %p62 = scmp.eq.s32.totalorder %s19, 1
    %p63 = por %p61, %p62
    %p65 = scmp.ne.s32.totalorder %s50, %s64
    %p66 = scmp.eq.s32.totalorder %s19, 0
    %p67 = por %p65, %p66
    %s69 = sadd.s32 %s68, 1
    %p72 = scmp.eq.s32.totalorder %s13, 1
    %p73 = scmp.ne.s32.totalorder %s68, %s70
    %p74 = scmp.eq.s32.totalorder %s13, 0
    %p75 = por %p73, %p74
    %p76 = scmp.ne.s32.totalorder %s68, %s70
    %p77 = scmp.eq.s32.totalorder %s18, 1
    %p78 = por %p76, %p77
    %p79 = scmp.ne.s32.totalorder %s70, %s71
    %p80 = scmp.eq.s32.totalorder %s18, 0
    %p81 = por %p79, %p80
    %p82 = scmp.ne.s32.totalorder %s70, %s71
    %p83 = scmp.eq.s32.totalorder %s19, 1
    %p84 = por %p82, %p83
    %p86 = scmp.ne.s32.totalorder %s71, %s85
    %p87 = scmp.eq.s32.totalorder %s19, 0
    %p88 = por %p86, %p87
    %s90 = sadd.s32 %s89, 1
    %p93 = scmp.eq.s32.totalorder %s13, 1
    %p94 = scmp.ne.s32.totalorder %s89, %s91
    %p95 = scmp.eq.s32.totalorder %s13, 0
    %p96 = por %p94, %p95
    %p97 = scmp.ne.s32.totalorder %s89, %s91
    %p98 = scmp.eq.s32.totalorder %s18, 1
    %p99 = por %p97, %p98
    %p100 = scmp.ne.s32.totalorder %s91, %s92
    %p101 = scmp.eq.s32.totalorder %s18, 0
    %p102 = por %p100, %p101
    %p103 = scmp.ne.s32.totalorder %s91, %s92
    %p104 = scmp.eq.s32.totalorder %s19, 1
    %p105 = por %p103, %p104
    %p107 = scmp.ne.s32.totalorder %s92, %s106
    %p108 = scmp.eq.s32.totalorder %s19, 0
    %p109 = por %p107, %p108
    %s111 = sadd.s32 %s110, 1
    %p114 = scmp.eq.s32.totalorder %s13, 1
    %p115 = scmp.ne.s32.totalorder %s110, %s112
    %p116 = scmp.eq.s32.totalorder %s13, 0
    %p117 = por %p115, %p116
    %p118 = scmp.ne.s32.totalorder %s110, %s112
    %p119 = scmp.eq.s32.totalorder %s18, 1
    %p120 = por %p118, %p119
    %p121 = scmp.ne.s32.totalorder %s112, %s113
    %p122 = scmp.eq.s32.totalorder %s18, 0
    %p123 = por %p121, %p122
    %p124 = scmp.ne.s32.totalorder %s112, %s113
    %p125 = scmp.eq.s32.totalorder %s19, 1
    %p126 = por %p124, %p125
    %p128 = scmp.ne.s32.totalorder %s113, %s127
    %p129 = scmp.eq.s32.totalorder %s19, 0
    %p130 = por %p128, %p129
    %s132 = sadd.s32 %s131, 1
    %p135 = scmp.eq.s32.totalorder %s13, 1
    %p136 = scmp.ne.s32.totalorder %s131, %s133
    %p137 = scmp.eq.s32.totalorder %s13, 0
    %p138 = por %p136, %p137
    %p139 = scmp.ne.s32.totalorder %s131, %s133
    %p140 = scmp.eq.s32.totalorder %s18, 1
    %p141 = por %p139, %p140
    %p142 = scmp.ne.s32.totalorder %s133, %s134
    %p143 = scmp.eq.s32.totalorder %s18, 0
    %p144 = por %p142, %p143
    %p145 = scmp.ne.s32.totalorder %s133, %s134
    %p146 = scmp.eq.s32.totalorder %s19, 1
    %p147 = por %p145, %p146
    %p149 = scmp.ne.s32.totalorder %s134, %s148
    %p150 = scmp.eq.s32.totalorder %s19, 0
    %p151 = por %p149, %p150
    %s153 = sadd.s32 %s152, 1
    %p156 = scmp.eq.s32.totalorder %s13, 1
    %p157 = scmp.ne.s32.totalorder %s152, %s154
    %p158 = scmp.eq.s32.totalorder %s13, 0
    %p159 = por %p157, %p158
    %p160 = scmp.ne.s32.totalorder %s152, %s154
    %p161 = scmp.eq.s32.totalorder %s18, 1
    %p162 = por %p160, %p161
    %p163 = scmp.ne.s32.totalorder %s154, %s155
    %p164 = scmp.eq.s32.totalorder %s18, 0
    %p165 = por %p163, %p164
    %p166 = scmp.ne.s32.totalorder %s154, %s155
    %p167 = scmp.eq.s32.totalorder %s19, 1
    %p168 = por %p166, %p167
    %p170 = scmp.ne.s32.totalorder %s155, %s169
    %p171 = scmp.eq.s32.totalorder %s19, 0
    %p172 = por %p170, %p171
    %s173 = ssub.s32 %s13, %s20
    %p174 = scmp.eq.s32.totalorder %s173, 0
    %s176 = sadd.s32 %s175, 1
    %s177 = scalar_select %p174, %s175, %s176
    %p180 = pneg %p174
    %p181 = scmp.eq.s32.totalorder %s13, 1
    %p182 = por %p180, %p181
    %p183 = scmp.ne.s32.totalorder %s175, %s178
    %p184 = scmp.eq.s32.totalorder %s13, 0
    %p185 = por %p183, %p184
    %p186 = scmp.ne.s32.totalorder %s175, %s178
    %p187 = scmp.eq.s32.totalorder %s18, 1
    %p188 = por %p186, %p187
    %p189 = scmp.ne.s32.totalorder %s178, %s179
    %p190 = scmp.eq.s32.totalorder %s18, 0
    %p191 = por %p189, %p190
    %p192 = scmp.ne.s32.totalorder %s178, %s179
    %p193 = scmp.eq.s32.totalorder %s19, 1
    %p194 = por %p192, %p193
    %p196 = scmp.ne.s32.totalorder %s179, %s195
    %p197 = scmp.eq.s32.totalorder %s19, 0
    %p198 = por %p196, %p197
    %p199 = scmp.le.s32.totalorder 1, %s13
    %p200 = scmp.lt.s32.totalorder %s13, 3
    %p201 = pnand %p199, %p200
    %p202 = pneg %p201
    // Predicated region
    $region9: #{tpu_custom_call.1} parent=5 // pred_check
      _
    $region10: #{tpu_custom_call.1} parent=5 // pred_check_branch
      %204 = sbr.rel (%p201) target = $region12
    $region11: #{tpu_custom_call.1} parent=5 // pred_region
      %s205 = ssub.s32 %s13, 1
      // Predicated region
      $region13: #{tpu_custom_call.1} parent=11 // pred_check
        %p206 = pneg %p60
      $region14: #{tpu_custom_call.1} parent=11 // pred_check_branch
        %208 = sbr.rel (%p206) target = $region16
      $region15: #{tpu_custom_call.1} parent=11 // pred_region
        _
      $region16: #{tpu_custom_call.1} parent=11 // pred_fallthru
        _
      // Predicated region
      $region17: #{tpu_custom_call.1} parent=11 // pred_check
        %p209 = pneg %p81
      $region18: #{tpu_custom_call.1} parent=11 // pred_check_branch
        %211 = sbr.rel (%p209) target = $region20
      $region19: #{tpu_custom_call.1} parent=11 // pred_region
        _
      $region20: #{tpu_custom_call.1} parent=11 // pred_fallthru
        _
      // Predicated region
      $region21: #{tpu_custom_call.1} parent=11 // pred_check
        %p212 = pneg %p102
      $region22: #{tpu_custom_call.1} parent=11 // pred_check_branch
        %214 = sbr.rel (%p212) target = $region24
      $region23: #{tpu_custom_call.1} parent=11 // pred_region
        _
      $region24: #{tpu_custom_call.1} parent=11 // pred_fallthru
        _
      // Predicated region
      $region25: #{tpu_custom_call.1} parent=11 // pred_check
        %p215 = pneg %p123
      $region26: #{tpu_custom_call.1} parent=11 // pred_check_branch
        %217 = sbr.rel (%p215) target = $region28
      $region27: #{tpu_custom_call.1} parent=11 // pred_region
        _
      $region28: #{tpu_custom_call.1} parent=11 // pred_fallthru
        _
      // Predicated region
      $region29: #{tpu_custom_call.1} parent=11 // pred_check
        %p218 = pneg %p144
      $region30: #{tpu_custom_call.1} parent=11 // pred_check_branch
        %220 = sbr.rel (%p218) target = $region32
      $region31: #{tpu_custom_call.1} parent=11 // pred_region
        _
      $region32: #{tpu_custom_call.1} parent=11 // pred_fallthru
        _
      // Predicated region
      $region33: #{tpu_custom_call.1} parent=11 // pred_check
        %p221 = pneg %p165
      $region34: #{tpu_custom_call.1} parent=11 // pred_check_branch
        %223 = sbr.rel (%p221) target = $region36
      $region35: #{tpu_custom_call.1} parent=11 // pred_region
        _
      $region36: #{tpu_custom_call.1} parent=11 // pred_fallthru
        _
    $region12: #{tpu_custom_call.1} parent=5 // pred_fallthru
      _
    %p224 = scmp.lt.s32.totalorder %s13, 2
    // Predicated region
    $region37: #{tpu_custom_call.1} parent=5 // pred_check
      %p225 = pneg %p224
    $region38: #{tpu_custom_call.1} parent=5 // pred_check_branch
      %227 = sbr.rel (%p225) target = $region40
    $region39: #{tpu_custom_call.1} parent=5 // pred_region
      // Predicated region
      $region41: #{tpu_custom_call.1} parent=39 // pred_check
        %p228 = pneg %p33
      $region42: #{tpu_custom_call.1} parent=39 // pred_check_branch
        %230 = sbr.rel (%p228) target = $region44
      $region43: #{tpu_custom_call.1} parent=39 // pred_region
        %s231 = smul.u32 14, %s13
        %p232 = scmp.lt.s32.totalorder %s231, 27
        %s233 = scalar_select %p232, %s231, 27
        %s234 = smul.addr %s233, 8
        %s235 = scalar_lea.vmem %s0, %s234
        %s236 = smul.u32 14, %s13
      $region44: #{tpu_custom_call.1} parent=39 // pred_fallthru
        _
    $region40: #{tpu_custom_call.1} parent=5 // pred_fallthru
      _
    %p237 = scmp.le.s32.totalorder 1, %s13
    %p238 = scmp.lt.s32.totalorder %s13, 3
    %p239 = pnand %p237, %p238
    %p240 = pneg %p239
    // Predicated region
    $region45: #{tpu_custom_call.1} parent=5 // pred_check
      _
    $region46: #{tpu_custom_call.1} parent=5 // pred_check_branch
      %242 = sbr.rel (%p239) target = $region48
    $region47: #{tpu_custom_call.1} parent=5 // pred_region
      %s243 = ssub.s32 %s13, 1
      %s244 = smul.u32 14, %s18
      %p245 = scmp.lt.s32.totalorder %s244, 27
      %s246 = scalar_select %p245, %s244, 27
      %s247 = smul.addr %s246, 8
      %s248 = scalar_lea.vmem %s0, %s247
      %p249 = pneg %p39
      %p250 = pneg %p36
      %p251 = pneg %p60
      %p252 = pneg %p57
      %p253 = pneg %p81
      %p254 = pneg %p78
      %p255 = pneg %p102
      %p256 = pneg %p99
      %p257 = pneg %p123
      %p258 = pneg %p120
      %p259 = pneg %p144
      %p260 = pneg %p141
      %p261 = pneg %p165
      %p262 = pneg %p162
      %p263 = pneg %p191
      %p264 = pneg %p188
      %s265 = smul.u32 14, %s18
      %p266 = scmp.lt.s32.totalorder %s265, 27
      %s267 = scalar_select %p266, %s265, 27
      %s268 = smul.addr %s267, 8
      %s269 = scalar_lea.vmem %s7, %s268
      %s270 = smul.u32 14, %s18
      %p271 = scmp.lt.s32.totalorder %s270, 27
      %s272 = scalar_select %p271, %s270, 27
      %s273 = smul.addr %s272, 8
      %s274 = scalar_lea.vmem %s0, %s273
      %s275 = smul.u32 14, %s18
      %s276 = smul.u32 14, %s18
      %p277 = scmp.lt.s32.totalorder %s276, 27
      %s278 = scalar_select %p277, %s276, 27
      %s279 = smul.addr %s278, 8
      %s280 = scalar_lea.vmem %s7, %s279
      %s281 = smul.u32 14, %s18
      %v283 = vld [vmem:[%s274] sm:$0xff]
      %v284 = vld [vmem:[%s274 + $0x8] sm:$0xff]
      %v285 = vld [vmem:[%s274 + $0x10] sm:$0xff]
      %v286 = vld [vmem:[%s274 + $0x18] sm:$0xff]
      %v287 = vld [vmem:[%s274 + $0x20] sm:$0xff]
      %v288 = vld [vmem:[%s274 + $0x28] sm:$0xff]
      %v289 = vld [vmem:[%s274 + $0x30] sm:$0xff]
      %v290 = vld [vmem:[%s274 + $0x38] sm:$0xff]
      %v291 = vld [vmem:[%s274 + $0x40] sm:$0xff]
      %v292 = vld [vmem:[%s274 + $0x48] sm:$0xff]
      %v293 = vld [vmem:[%s274 + $0x50] sm:$0xff]
      %v294 = vld [vmem:[%s274 + $0x58] sm:$0xff]
      %v295 = vld [vmem:[%s274 + $0x60] sm:$0xff]
      %v296 = vld [vmem:[%s274 + $0x68] sm:$0xff]
      %v297 = vpack.c.bf16 %v284, %v283
      %v298 = vpack.c.bf16 %v286, %v285
      %v299 = vpack.c.bf16 %v288, %v287
      %v300 = vpack.c.bf16 %v290, %v289
      %v301 = vpack.c.bf16 %v292, %v291
      %v302 = vpack.c.bf16 %v294, %v293
      %v303 = vpack.c.bf16 %v296, %v295
      %v304 = vld [vmem:[%s1] sm:$0xf]
      %v305 = vld [vmem:[%s1 + $0x4] sm:$0xf]
      %v306 = vld [vmem:[%s1 + $0x8] sm:$0xf]
      %v307 = vld [vmem:[%s1 + $0xc] sm:$0xf]
      %v308 = vld [vmem:[%s2] sm:$0x1]
      %v310 = vlaneseq
      %v311 = vshrl.u32 %v310, 7
      %v312 = vsub.s32 0, %v311
      %v313 = vrot.slane %v308, %v312
      %v319 = vunpack.c.l.b16 %v304
      %v320 = vunpack.c.l.b16 %v305
      %v321 = vunpack.c.l.b16 %v306
      %v322 = vunpack.c.l.b16 %v307
      %v323 = vpack.c.b16 %v320, %v319
      %v324 = vpack.c.b16 %v322, %v321
      %vm327 = vcmask 261120
      %v329 = vsel %vm327, %v297, 0
      %v332 = vsel %vm327, %v298, 0
      %v335 = vsel %vm327, %v299, 0
      %v338 = vsel %vm327, %v300, 0
      %v341 = vsel %vm327, %v301, 0
      %v344 = vsel %vm327, %v302, 0
      %v347 = vsel %vm327, %v303, 0
      %349 = vmatprep.subr.bf16.mxu0 0
      %350 = vmatpush1.bf16.msra.mxu0 %v323
      %351 = vmatprep.subr.bf16.mxu0 0
      %352 = vmatpush1.bf16.msra.mxu0 %v324
      %353 = vmatprep.subr.bf16.mxu0 0
      %354 = vmatpush1.bf16.msra.mxu0 0
      %355 = vmatprep.subr.bf16.mxu0 0
      %356 = vmatpush1.bf16.msra.mxu0 0
      %357 = vmatprep.subr.bf16.mxu0 0
      %358 = vmatpush1.bf16.msra.mxu0 0
      %359 = vmatprep.subr.bf16.mxu0 0
      %360 = vmatpush1.bf16.msra.mxu0 0
      %361 = vmatprep.subr.bf16.mxu0 0
      %362 = vmatpush1.bf16.msra.mxu0 0
      %363 = vmatprep.subr.bf16.mxu0 0
      %364 = vmatpush1.bf16.msra.mxu0 0
      %365 = vmatprep.subr.bf16.mxu0 0
      %366 = vmatpush1.bf16.msra.mxu0 0
      %367 = vmatprep.subr.bf16.mxu0 0
      %368 = vmatpush1.bf16.msra.mxu0 0
      %369 = vmatprep.subr.bf16.mxu0 0
      %370 = vmatpush1.bf16.msra.mxu0 0
      %371 = vmatprep.subr.bf16.mxu0 0
      %372 = vmatpush1.bf16.msra.mxu0 0
      %373 = vmatprep.subr.bf16.mxu0 0
      %374 = vmatpush1.bf16.msra.mxu0 0
      %375 = vmatprep.subr.bf16.mxu0 0
      %376 = vmatpush1.bf16.msra.mxu0 0
      %377 = vmatprep.subr.bf16.mxu0 0
      %378 = vmatpush1.bf16.msra.mxu0 0
      %379 = vmatprep.subr.bf16.mxu0 0
      %380 = vmatpush1.bf16.msra.mxu0 0
      %381 = vmatprep.mubr.bf16.mxu0 0
      %382 = vmatmul.mubr.bf16.gmra.mrb[0].mxu0 %v329
      %v383 = vpop.f32.mrb[0].mxu0
      %v384 = vadd.f32 %v313, %v383
      %v385 = vpop.f32.mrb[0].mxu0
      %v386 = vpop.f32.mrb[0].mxu0
      %v387 = vadd.f32 %v313, %v386
      %v388 = vpop.f32.mrb[0].mxu0
      %389 = vmatprep.mubr.bf16.mxu0 0
      %390 = vmatmul.mubr.bf16.gmra.mrb[0].mxu0 %v332
      %v391 = vpop.f32.mrb[0].mxu0
      %v392 = vadd.f32 %v313, %v391
      %v393 = vpop.f32.mrb[0].mxu0
      %v394 = vpop.f32.mrb[0].mxu0
      %v395 = vadd.f32 %v313, %v394
      %v396 = vpop.f32.mrb[0].mxu0
      %397 = vmatprep.mubr.bf16.mxu0 0
      %398 = vmatmul.mubr.bf16.gmra.mrb[0].mxu0 %v335
      %v399 = vpop.f32.mrb[0].mxu0
      %v400 = vadd.f32 %v313, %v399
      %v401 = vpop.f32.mrb[0].mxu0
      %v402 = vpop.f32.mrb[0].mxu0
      %v403 = vadd.f32 %v313, %v402
      %v404 = vpop.f32.mrb[0].mxu0
      %405 = vmatprep.mubr.bf16.mxu0 0
      %406 = vmatmul.mubr.bf16.gmra.mrb[0].mxu0 %v338
      %v407 = vpop.f32.mrb[0].mxu0
      %v408 = vadd.f32 %v313, %v407
      %v409 = vpop.f32.mrb[0].mxu0
      %v410 = vpop.f32.mrb[0].mxu0
      %v411 = vadd.f32 %v313, %v410
      %v412 = vpop.f32.mrb[0].mxu0
      %413 = vmatprep.mubr.bf16.mxu0 0
      %414 = vmatmul.mubr.bf16.gmra.mrb[0].mxu0 %v341
      %v415 = vpop.f32.mrb[0].mxu0
      %v416 = vadd.f32 %v313, %v415
      %v417 = vpop.f32.mrb[0].mxu0
      %v418 = vpop.f32.mrb[0].mxu0
      %v419 = vadd.f32 %v313, %v418
      %v420 = vpop.f32.mrb[0].mxu0
      %421 = vmatprep.mubr.bf16.mxu0 0
      %422 = vmatmul.mubr.bf16.gmra.mrb[0].mxu0 %v344
      %v423 = vpop.f32.mrb[0].mxu0
      %v424 = vadd.f32 %v313, %v423
      %v425 = vpop.f32.mrb[0].mxu0
      %v426 = vpop.f32.mrb[0].mxu0
      %v427 = vadd.f32 %v313, %v426
      %v428 = vpop.f32.mrb[0].mxu0
      %429 = vmatprep.mubr.bf16.mxu0 0
      %430 = vmatmul.mubr.bf16.gmra.mrb[0].mxu0 %v347
      %v431 = vpop.f32.mrb[0].mxu0
      %v432 = vadd.f32 %v313, %v431
      %v433 = vpop.f32.mrb[0].mxu0
      %v434 = vpop.f32.mrb[0].mxu0
      %v435 = vadd.f32 %v313, %v434
      %v436 = vpop.f32.mrb[0].mxu0
      %437 = vdwg.mxu0
      %v438 = vmax.f32 %v384, 0.0
      %v439 = vmax.f32 %v387, 0.0
      %v440 = vmax.f32 %v392, 0.0
      %v441 = vmax.f32 %v395, 0.0
      %v442 = vmax.f32 %v400, 0.0
      %v443 = vmax.f32 %v403, 0.0
      %v444 = vmax.f32 %v408, 0.0
      %v445 = vmax.f32 %v411, 0.0
      %v446 = vmax.f32 %v416, 0.0
      %v447 = vmax.f32 %v419, 0.0
      %v448 = vmax.f32 %v424, 0.0
      %v449 = vmax.f32 %v427, 0.0
      %v450 = vmax.f32 %v432, 0.0
      %v451 = vmax.f32 %v435, 0.0
      %v452 = vpack.c.bf16 %v439, %v438
      %v453 = vpack.c.bf16 %v441, %v440
      %v454 = vpack.c.bf16 %v443, %v442
      %v455 = vpack.c.bf16 %v445, %v444
      %v456 = vpack.c.bf16 %v447, %v446
      %v457 = vpack.c.bf16 %v449, %v448
      %v458 = vpack.c.bf16 %v451, %v450
      %v459 = vld [vmem:[%s3] sm:$0xf]
      %v460 = vld [vmem:[%s3 + $0x4] sm:$0xf]
      %v461 = vld [vmem:[%s3 + $0x8] sm:$0xf]
      %v462 = vld [vmem:[%s3 + $0xc] sm:$0xf]
      %v463 = vld [vmem:[%s3 + $0x10] sm:$0xf]
      %v464 = vld [vmem:[%s3 + $0x14] sm:$0xf]
      %v465 = vld [vmem:[%s3 + $0x18] sm:$0xf]
      %v466 = vld [vmem:[%s3 + $0x1c] sm:$0xf]
      %v467 = vld [vmem:[%s3 + $0x20] sm:$0xf]
      %v468 = vld [vmem:[%s3 + $0x24] sm:$0xf]
      %v469 = vld [vmem:[%s3 + $0x28] sm:$0xf]
      %v470 = vld [vmem:[%s3 + $0x2c] sm:$0xf]
      %v471 = vld [vmem:[%s3 + $0x30] sm:$0xf]
      %v472 = vld [vmem:[%s3 + $0x34] sm:$0xf]
      %v473 = vld [vmem:[%s3 + $0x38] sm:$0xf]
      %v474 = vld [vmem:[%s3 + $0x3c] sm:$0xf]
      %v475 = vld [vmem:[%s4] sm:$0x1]
      %v477 = vlaneseq
      %v478 = vshrl.u32 %v477, 7
      %v479 = vsub.s32 0, %v478
      %v480 = vrot.slane %v475, %v479
      %v498 = vunpack.c.l.b16 %v459
      %v499 = vunpack.c.l.b16 %v460
      %v500 = vunpack.c.l.b16 %v461
      %v501 = vunpack.c.l.b16 %v462
      %v502 = vunpack.c.l.b16 %v463
      %v503 = vunpack.c.l.b16 %v464
      %v504 = vunpack.c.l.b16 %v465
      %v505 = vunpack.c.l.b16 %v466
      %v506 = vunpack.c.l.b16 %v467
      %v507 = vunpack.c.l.b16 %v468
      %v508 = vunpack.c.l.b16 %v469
      %v509 = vunpack.c.l.b16 %v470
      %v510 = vunpack.c.l.b16 %v471
      %v511 = vunpack.c.l.b16 %v472
      %v512 = vunpack.c.l.b16 %v473
      %v513 = vunpack.c.l.b16 %v474
      %v514 = vpack.c.b16 %v499, %v498
      %v515 = vpack.c.b16 %v501, %v500
      %v516 = vpack.c.b16 %v503, %v502
      %v517 = vpack.c.b16 %v505, %v504
      %v518 = vpack.c.b16 %v507, %v506
      %v519 = vpack.c.b16 %v509, %v508
      %v520 = vpack.c.b16 %v511, %v510
      %v521 = vpack.c.b16 %v513, %v512
      %530 = vmatprep.subr.bf16.mxu0 0
      %531 = vmatpush1.bf16.msra.mxu0 %v514
      %532 = vmatprep.subr.bf16.mxu0 0
      %533 = vmatpush1.bf16.msra.mxu0 %v515
      %534 = vmatprep.subr.bf16.mxu0 0
      %535 = vmatpush1.bf16.msra.mxu0 %v516
      %536 = vmatprep.subr.bf16.mxu0 0
      %537 = vmatpush1.bf16.msra.mxu0 %v517
      %538 = vmatprep.subr.bf16.mxu0 0
      %539 = vmatpush1.bf16.msra.mxu0 %v518
      %540 = vmatprep.subr.bf16.mxu0 0
      %541 = vmatpush1.bf16.msra.mxu0 %v519
      %542 = vmatprep.subr.bf16.mxu0 0
      %543 = vmatpush1.bf16.msra.mxu0 %v520
      %544 = vmatprep.subr.bf16.mxu0 0
      %545 = vmatpush1.bf16.msra.mxu0 %v521
      %546 = vmatprep.subr.bf16.mxu0 0
      %547 = vmatpush1.bf16.msra.mxu0 0
      %548 = vmatprep.subr.bf16.mxu0 0
      %549 = vmatpush1.bf16.msra.mxu0 0
      %550 = vmatprep.subr.bf16.mxu0 0
      %551 = vmatpush1.bf16.msra.mxu0 0
      %552 = vmatprep.subr.bf16.mxu0 0
      %553 = vmatpush1.bf16.msra.mxu0 0
      %554 = vmatprep.subr.bf16.mxu0 0
      %555 = vmatpush1.bf16.msra.mxu0 0
      %556 = vmatprep.subr.bf16.mxu0 0
      %557 = vmatpush1.bf16.msra.mxu0 0
      %558 = vmatprep.subr.bf16.mxu0 0
      %559 = vmatpush1.bf16.msra.mxu0 0
      %560 = vmatprep.subr.bf16.mxu0 0
      %561 = vmatpush1.bf16.msra.mxu0 0
      %562 = vmatprep.mubr.bf16.mxu0 0
      %563 = vmatmul.mubr.bf16.gmra.mrb[0].mxu0 %v452
      %v564 = vpop.f32.mrb[0].mxu0
      %v565 = vadd.f32 %v480, %v564
      %v566 = vpop.f32.mrb[0].mxu0
      %v567 = vpop.f32.mrb[0].mxu0
      %v568 = vadd.f32 %v480, %v567
      %v569 = vpop.f32.mrb[0].mxu0
      %570 = vmatprep.mubr.bf16.mxu0 0
      %571 = vmatmul.mubr.bf16.gmra.mrb[0].mxu0 %v453
      %v572 = vpop.f32.mrb[0].mxu0
      %v573 = vadd.f32 %v480, %v572
      %v574 = vpop.f32.mrb[0].mxu0
      %v575 = vpop.f32.mrb[0].mxu0
      %v576 = vadd.f32 %v480, %v575
      %v577 = vpop.f32.mrb[0].mxu0
      %578 = vmatprep.mubr.bf16.mxu0 0
      %579 = vmatmul.mubr.bf16.gmra.mrb[0].mxu0 %v454
      %v580 = vpop.f32.mrb[0].mxu0
      %v581 = vadd.f32 %v480, %v580
      %v582 = vpop.f32.mrb[0].mxu0
      %v583 = vpop.f32.mrb[0].mxu0
      %v584 = vadd.f32 %v480, %v583
      %v585 = vpop.f32.mrb[0].mxu0
      %586 = vmatprep.mubr.bf16.mxu0 0
      %587 = vmatmul.mubr.bf16.gmra.mrb[0].mxu0 %v455
      %v588 = vpop.f32.mrb[0].mxu0
      %v589 = vadd.f32 %v480, %v588
      %v590 = vpop.f32.mrb[0].mxu0
      %v591 = vpop.f32.mrb[0].mxu0
      %v592 = vadd.f32 %v480, %v591
      %v593 = vpop.f32.mrb[0].mxu0
      %594 = vmatprep.mubr.bf16.mxu0 0
      %595 = vmatmul.mubr.bf16.gmra.mrb[0].mxu0 %v456
      %v596 = vpop.f32.mrb[0].mxu0
      %v597 = vadd.f32 %v480, %v596
      %v598 = vpop.f32.mrb[0].mxu0
      %v599 = vpop.f32.mrb[0].mxu0
      %v600 = vadd.f32 %v480, %v599
      %v601 = vpop.f32.mrb[0].mxu0
      %602 = vmatprep.mubr.bf16.mxu0 0
      %603 = vmatmul.mubr.bf16.gmra.mrb[0].mxu0 %v457
      %v604 = vpop.f32.mrb[0].mxu0
      %v605 = vadd.f32 %v480, %v604
      %v606 = vpop.f32.mrb[0].mxu0
      %v607 = vpop.f32.mrb[0].mxu0
      %v608 = vadd.f32 %v480, %v607
      %v609 = vpop.f32.mrb[0].mxu0
      %610 = vmatprep.mubr.bf16.mxu0 0
      %611 = vmatmul.mubr.bf16.gmra.mrb[0].mxu0 %v458
      %v612 = vpop.f32.mrb[0].mxu0
      %v613 = vadd.f32 %v480, %v612
      %v614 = vpop.f32.mrb[0].mxu0
      %v615 = vpop.f32.mrb[0].mxu0
      %v616 = vadd.f32 %v480, %v615
      %v617 = vpop.f32.mrb[0].mxu0
      %618 = vdwg.mxu0
      %v619 = vmax.f32 %v565, 0.0
      %v620 = vmax.f32 %v568, 0.0
      %v621 = vmax.f32 %v573, 0.0
      %v622 = vmax.f32 %v576, 0.0
      %v623 = vmax.f32 %v581, 0.0
      %v624 = vmax.f32 %v584, 0.0
      %v625 = vmax.f32 %v589, 0.0
      %v626 = vmax.f32 %v592, 0.0
      %v627 = vmax.f32 %v597, 0.0
      %v628 = vmax.f32 %v600, 0.0
      %v629 = vmax.f32 %v605, 0.0
      %v630 = vmax.f32 %v608, 0.0
      %v631 = vmax.f32 %v613, 0.0
      %v632 = vmax.f32 %v616, 0.0
      %v633 = vpack.c.bf16 %v620, %v619
      %v634 = vpack.c.bf16 %v622, %v621
      %v635 = vpack.c.bf16 %v624, %v623
      %v636 = vpack.c.bf16 %v626, %v625
      %v637 = vpack.c.bf16 %v628, %v627
      %v638 = vpack.c.bf16 %v630, %v629
      %v639 = vpack.c.bf16 %v632, %v631
      %v640 = vld [vmem:[%s5] sm:$0xf]
      %v641 = vld [vmem:[%s5 + $0x4] sm:$0xf]
      %v642 = vld [vmem:[%s5 + $0x8] sm:$0xf]
      %v643 = vld [vmem:[%s5 + $0xc] sm:$0xf]
      %v644 = vld [vmem:[%s5 + $0x10] sm:$0xf]
      %v645 = vld [vmem:[%s5 + $0x14] sm:$0xf]
      %v646 = vld [vmem:[%s5 + $0x18] sm:$0xf]
      %v647 = vld [vmem:[%s5 + $0x1c] sm:$0xf]
      %v648 = vld [vmem:[%s5 + $0x20] sm:$0xf]
      %v649 = vld [vmem:[%s5 + $0x24] sm:$0xf]
      %v650 = vld [vmem:[%s5 + $0x28] sm:$0xf]
      %v651 = vld [vmem:[%s5 + $0x2c] sm:$0xf]
      %v652 = vld [vmem:[%s5 + $0x30] sm:$0xf]
      %v653 = vld [vmem:[%s5 + $0x34] sm:$0xf]
      %v654 = vld [vmem:[%s5 + $0x38] sm:$0xf]
      %v655 = vld [vmem:[%s5 + $0x3c] sm:$0xf]
      %v656 = vld [vmem:[%s6] sm:$0x1]
      %v658 = vlaneseq
      %v659 = vshrl.u32 %v658, 7
      %v660 = vsub.s32 0, %v659
      %v661 = vrot.slane %v656, %v660
      %v679 = vunpack.c.l.b16 %v640
      %v680 = vunpack.c.l.b16 %v641
      %v681 = vunpack.c.l.b16 %v642
      %v682 = vunpack.c.l.b16 %v643
      %v683 = vunpack.c.l.b16 %v644
      %v684 = vunpack.c.l.b16 %v645
      %v685 = vunpack.c.l.b16 %v646
      %v686 = vunpack.c.l.b16 %v647
      %v687 = vunpack.c.l.b16 %v648
      %v688 = vunpack.c.l.b16 %v649
      %v689 = vunpack.c.l.b16 %v650
      %v690 = vunpack.c.l.b16 %v651
      %v691 = vunpack.c.l.b16 %v652
      %v692 = vunpack.c.l.b16 %v653
      %v693 = vunpack.c.l.b16 %v654
      %v694 = vunpack.c.l.b16 %v655
      %v695 = vpack.c.b16 %v680, %v679
      %v696 = vpack.c.b16 %v682, %v681
      %v697 = vpack.c.b16 %v684, %v683
      %v698 = vpack.c.b16 %v686, %v685
      %v699 = vpack.c.b16 %v688, %v687
      %v700 = vpack.c.b16 %v690, %v689
      %v701 = vpack.c.b16 %v692, %v691
      %v702 = vpack.c.b16 %v694, %v693
      %711 = vmatprep.subr.bf16.mxu0 0
      %712 = vmatpush1.bf16.msra.mxu0 %v695
      %713 = vmatprep.subr.bf16.mxu0 0
      %714 = vmatpush1.bf16.msra.mxu0 %v696
      %715 = vmatprep.subr.bf16.mxu0 0
      %716 = vmatpush1.bf16.msra.mxu0 %v697
      %717 = vmatprep.subr.bf16.mxu0 0
      %718 = vmatpush1.bf16.msra.mxu0 %v698
      %719 = vmatprep.subr.bf16.mxu0 0
      %720 = vmatpush1.bf16.msra.mxu0 %v699
      %721 = vmatprep.subr.bf16.mxu0 0
      %722 = vmatpush1.bf16.msra.mxu0 %v700
      %723 = vmatprep.subr.bf16.mxu0 0
      %724 = vmatpush1.bf16.msra.mxu0 %v701
      %725 = vmatprep.subr.bf16.mxu0 0
      %726 = vmatpush1.bf16.msra.mxu0 %v702
      %727 = vmatprep.subr.bf16.mxu0 0
      %728 = vmatpush1.bf16.msra.mxu0 0
      %729 = vmatprep.subr.bf16.mxu0 0
      %730 = vmatpush1.bf16.msra.mxu0 0
      %731 = vmatprep.subr.bf16.mxu0 0
      %732 = vmatpush1.bf16.msra.mxu0 0
      %733 = vmatprep.subr.bf16.mxu0 0
      %734 = vmatpush1.bf16.msra.mxu0 0
      %735 = vmatprep.subr.bf16.mxu0 0
      %736 = vmatpush1.bf16.msra.mxu0 0
      %737 = vmatprep.subr.bf16.mxu0 0
      %738 = vmatpush1.bf16.msra.mxu0 0
      %739 = vmatprep.subr.bf16.mxu0 0
      %740 = vmatpush1.bf16.msra.mxu0 0
      %741 = vmatprep.subr.bf16.mxu0 0
      %742 = vmatpush1.bf16.msra.mxu0 0
      %743 = vmatprep.mubr.bf16.mxu0 0
      %744 = vmatmul.mubr.bf16.gmra.mrb[0].mxu0 %v633
      %v745 = vpop.f32.mrb[0].mxu0
      %v746 = vadd.f32 %v661, %v745
      %v747 = vpop.f32.mrb[0].mxu0
      %v748 = vpop.f32.mrb[0].mxu0
      %v749 = vadd.f32 %v661, %v748
      %v750 = vpop.f32.mrb[0].mxu0
      %751 = vmatprep.mubr.bf16.mxu0 0
      %752 = vmatmul.mubr.bf16.gmra.mrb[0].mxu0 %v634
      %v753 = vpop.f32.mrb[0].mxu0
      %v754 = vadd.f32 %v661, %v753
      %v755 = vpop.f32.mrb[0].mxu0
      %v756 = vpop.f32.mrb[0].mxu0
      %v757 = vadd.f32 %v661, %v756
      %v758 = vpop.f32.mrb[0].mxu0
      %759 = vmatprep.mubr.bf16.mxu0 0
      %760 = vmatmul.mubr.bf16.gmra.mrb[0].mxu0 %v635
      %v761 = vpop.f32.mrb[0].mxu0
      %v762 = vadd.f32 %v661, %v761
      %v763 = vpop.f32.mrb[0].mxu0
      %v764 = vpop.f32.mrb[0].mxu0
      %v765 = vadd.f32 %v661, %v764
      %v766 = vpop.f32.mrb[0].mxu0
      %767 = vmatprep.mubr.bf16.mxu0 0
      %768 = vmatmul.mubr.bf16.gmra.mrb[0].mxu0 %v636
      %v769 = vpop.f32.mrb[0].mxu0
      %v770 = vadd.f32 %v661, %v769
      %v771 = vpop.f32.mrb[0].mxu0
      %v772 = vpop.f32.mrb[0].mxu0
      %v773 = vadd.f32 %v661, %v772
      %v774 = vpop.f32.mrb[0].mxu0
      %775 = vmatprep.mubr.bf16.mxu0 0
      %776 = vmatmul.mubr.bf16.gmra.mrb[0].mxu0 %v637
      %v777 = vpop.f32.mrb[0].mxu0
      %v778 = vadd.f32 %v661, %v777
      %v779 = vpop.f32.mrb[0].mxu0
      %v780 = vpop.f32.mrb[0].mxu0
      %v781 = vadd.f32 %v661, %v780
      %v782 = vpop.f32.mrb[0].mxu0
      %783 = vmatprep.mubr.bf16.mxu0 0
      %784 = vmatmul.mubr.bf16.gmra.mrb[0].mxu0 %v638
      %v785 = vpop.f32.mrb[0].mxu0
      %v786 = vadd.f32 %v661, %v785
      %v787 = vpop.f32.mrb[0].mxu0
      %v788 = vpop.f32.mrb[0].mxu0
      %v789 = vadd.f32 %v661, %v788
      %v790 = vpop.f32.mrb[0].mxu0
      %791 = vmatprep.mubr.bf16.mxu0 0
      %792 = vmatmul.mubr.bf16.gmra.mrb[0].mxu0 %v639
      %v793 = vpop.f32.mrb[0].mxu0
      %v794 = vadd.f32 %v661, %v793
      %v795 = vpop.f32.mrb[0].mxu0
      %v796 = vpop.f32.mrb[0].mxu0
      %v797 = vadd.f32 %v661, %v796
      %v798 = vpop.f32.mrb[0].mxu0
      %799 = vdwg.mxu0
      %v800 = vmax.f32 %v746, 0.0
      %v801 = vmax.f32 %v749, 0.0
      %v802 = vmax.f32 %v754, 0.0
      %v803 = vmax.f32 %v757, 0.0
      %v804 = vmax.f32 %v762, 0.0
      %v805 = vmax.f32 %v765, 0.0
      %v806 = vmax.f32 %v770, 0.0
      %v807 = vmax.f32 %v773, 0.0
      %v808 = vmax.f32 %v778, 0.0
      %v809 = vmax.f32 %v781, 0.0
      %v810 = vmax.f32 %v786, 0.0
      %v811 = vmax.f32 %v789, 0.0
      %v812 = vmax.f32 %v794, 0.0
      %v813 = vmax.f32 %v797, 0.0
      %vm814 = vcmask 130048
      %815 = vst.msk [vmem:[%s280] sm:$0xff] %vm814, %v800
      %816 = vst.msk [vmem:[%s280 + $0x8] sm:$0xff] %vm814, %v801
      %817 = vst.msk [vmem:[%s280 + $0x10] sm:$0xff] %vm814, %v802
      %818 = vst.msk [vmem:[%s280 + $0x18] sm:$0xff] %vm814, %v803
      %819 = vst.msk [vmem:[%s280 + $0x20] sm:$0xff] %vm814, %v804
      %820 = vst.msk [vmem:[%s280 + $0x28] sm:$0xff] %vm814, %v805
      %821 = vst.msk [vmem:[%s280 + $0x30] sm:$0xff] %vm814, %v806
      %822 = vst.msk [vmem:[%s280 + $0x38] sm:$0xff] %vm814, %v807
      %823 = vst.msk [vmem:[%s280 + $0x40] sm:$0xff] %vm814, %v808
      %824 = vst.msk [vmem:[%s280 + $0x48] sm:$0xff] %vm814, %v809
      %825 = vst.msk [vmem:[%s280 + $0x50] sm:$0xff] %vm814, %v810
      %826 = vst.msk [vmem:[%s280 + $0x58] sm:$0xff] %vm814, %v811
      %827 = vst.msk [vmem:[%s280 + $0x60] sm:$0xff] %vm814, %v812
      %828 = vst.msk [vmem:[%s280 + $0x68] sm:$0xff] %vm814, %v813
      %s829 = smul.u32 14, %s18
      %p830 = scmp.lt.s32.totalorder %s829, 27
      %s831 = scalar_select %p830, %s829, 27
      %s832 = smul.addr %s831, 8
      %s833 = scalar_lea.vmem %s7, %s832
      // Predicated region
      $region49: #{tpu_custom_call.1} parent=47 // pred_check
        %p834 = pneg %p188
      $region50: #{tpu_custom_call.1} parent=47 // pred_check_branch
        %836 = sbr.rel (%p834) target = $region52
      $region51: #{tpu_custom_call.1} parent=47 // pred_region
        %s837 = smul.u32 14, %s18
      $region52: #{tpu_custom_call.1} parent=47 // pred_fallthru
        _
    $region48: #{tpu_custom_call.1} parent=5 // pred_fallthru
      _
    %p838 = scmp.le.s32.totalorder 2, %s13
    // Predicated region
    $region53: #{tpu_custom_call.1} parent=5 // pred_check
      %p839 = pneg %p838
    $region54: #{tpu_custom_call.1} parent=5 // pred_check_branch
      %841 = sbr.rel (%p839) target = $region56
    $region55: #{tpu_custom_call.1} parent=5 // pred_region
      %s842 = ssub.s32 %s13, 2
      // Predicated region
      $region57: #{tpu_custom_call.1} parent=55 // pred_check
        %p843 = pneg %p194
      $region58: #{tpu_custom_call.1} parent=55 // pred_check_branch
        %845 = sbr.rel (%p843) target = $region60
      $region59: #{tpu_custom_call.1} parent=55 // pred_region
        %s846 = smul.u32 14, %s19
        %p847 = scmp.lt.s32.totalorder %s846, 27
        %s848 = scalar_select %p847, %s846, 27
        %s849 = smul.addr %s848, 8
        %s850 = scalar_lea.vmem %s7, %s849
      $region60: #{tpu_custom_call.1} parent=55 // pred_fallthru
        _
    $region56: #{tpu_custom_call.1} parent=5 // pred_fallthru
      _
  $region6: #{tpu_custom_call.1} parent=0 // loop_footer
    %s17 = sadd.s32 1, %s13
  $region7: #{tpu_custom_call.1} parent=0 // loop_footer_branch
    %12 = sbr.rel target = $region3
  $region8: #{tpu_custom_call.1} parent=0 // loop_exit
    _

</llo_original>
